<compile_context>
chip_gen: v7x
topology: tpu7x:2x2x1
jax: 0.10.0
libtpu: 0.0.40
codegen_flags: <defaults>
</compile_context>

<pallas_src>
import functools

import jax
import jax.numpy as jnp
import numpy as np
from jax.experimental import pallas as pl
from jax.experimental.pallas import tpu as pltpu

_VMEM_BUDGET_BYTES = 30 * 1024 * 1024   # conservative self-estimate target (v7x-safe)
_VMEM_LIMIT_BYTES = 48 * 1024 * 1024    # explicit scoped-VMEM limit (< 64 MiB v7x physical)


def _round_up(x, m):
    return ((x + m - 1) // m) * m


def _mixing_kernel(q_ref, mu_ref, wmix_ref, w1_ref, b1_ref, w2_ref, b2_ref,
                   q_out_ref, mu_out_ref, *, F, epsilon):
    f32 = jnp.float32
    w_dt = w1_ref.dtype

    q_in = q_ref[...]                        # (TN, F)   storage dtype
    mu_in = mu_ref[...]                      # (TN, 3F)  lane-concat of 3 cartesian comps
    wmix = wmix_ref[...]                     # (F, 2F)

    # mu_channel_mix: Linear(F -> 2F, no bias).  One MXU dot per cartesian component;
    # row-independent, no sublane stacking.  mu_V / mu_W lane-slices at offset F are
    # aligned (free) when F % 128 == 0.
    V = [None] * 3
    W = [None] * 3
    for c in range(3):
        mm = jnp.dot(mu_in[:, c * F:(c + 1) * F], wmix,
                     preferred_element_type=f32)               # (TN, 2F), f32 accumulate
        V[c] = mm[:, :F]
        W[c] = mm[:, F:]

    # ||mu_V|| over the cartesian axis (f32, epsilon inside the sqrt).
    mu_Vn = jnp.sqrt(V[0] * V[0] + V[1] * V[1] + V[2] * V[2] + epsilon)   # (TN, F)

    # intra_atomic_net layer 1: [q, mu_Vn] @ W1 + b1, done as two dots against the
    # 8-aligned sublane halves of W1 (avoids materializing the lane-concat of ctx).
    h = (jnp.dot(q_in, w1_ref[:F, :], preferred_element_type=f32)
         + jnp.dot(mu_Vn.astype(w_dt), w1_ref[F:, :], preferred_element_type=f32)
         + b1_ref[...].astype(f32))
    h = h * jax.lax.logistic(h)              # SiLU
    # TODO(synk): activation_function is configurable in the PyTorch module; only SiLU here.

    # intra_atomic_net layer 2: single (TN, F) @ (F, 3F) dot; dq/dmu/dqmu slices at
    # F and 2F are lane-aligned when F % 128 == 0.
    x = (jnp.dot(h.astype(w_dt), w2_ref[...], preferred_element_type=f32)
         + b2_ref[...].astype(f32))
    dq = x[:, :F]
    dmu = x[:, F:2 * F]
    dqmu = x[:, 2 * F:]

    # sum(mu_V * mu_W) over the cartesian axis.
    vw = V[0] * W[0] + V[1] * W[1] + V[2] * W[2]               # (TN, F)

    q_out_ref[...] = (q_in.astype(f32) + dq + dqmu * vw).astype(q_out_ref.dtype)
    # mu update: three direct lane-slice stores (no concatenate temporary).
    for c in range(3):
        mu_out_ref[:, c * F:(c + 1) * F] = (
            mu_in[:, c * F:(c + 1) * F].astype(f32) + dmu * W[c]
        ).astype(mu_out_ref.dtype)


def painn_mixing(q, mu, wmix, w1, b1, w2, b2, *, epsilon=1e-8, tile_n=1024):
    """q: (N, 1, F) scalar features, mu: (N, 3, F) vector features.

    Weights are stored (in, out) so that y = x @ W + b (i.e. transposed relative to
    torch.nn.Linear storage).  Returns updated (q, mu) with the input shapes/dtypes.
    """
    N, _, F = q.shape

    # Lane-dense 2-D views of the atom tensors (free reshapes, no transpose, no pad).
    q2 = q.reshape(N, F)
    mu2 = mu.reshape(N, 3 * F)

    # --- atom-tile selection -------------------------------------------------------
    # HBM-bound kernel: prefer big tiles, but keep >= 4 grid steps when N allows (v7x
    # megacore) and stay inside a conservative VMEM budget (v7x has 64 MiB physical).
    isz = max(jnp.dtype(q.dtype).itemsize, jnp.dtype(wmix.dtype).itemsize)

    def vmem_estimate(t):
        io = 2 * 2 * (t * F + t * 3 * F) * isz        # double-buffered in + out tiles
        wts = 2 * (7 * F * F + 4 * F) * isz           # double-buffered weights/biases
        tmp = 18 * t * F * 4                          # rough f32 in-kernel temporaries
        return io + wts + tmp

    tn = min(tile_n, max(8, _round_up(pl.cdiv(N, 4), 8)))
    while tn > 8 and vmem_estimate(tn) > _VMEM_BUDGET_BYTES:
        tn = max(8, _round_up(tn // 2, 8))
    if tn >= N:
        tn = N                                        # single full-extent block

    grid = (pl.cdiv(N, tn),)                          # ragged tail masked by Pallas

    kernel = functools.partial(_mixing_kernel, F=F, epsilon=epsilon)
    full = lambda i: (0, 0)
    row = lambda i: (i, 0)

    q_out, mu_out = pl.pallas_call(
        kernel,
        out_shape=(jax.ShapeDtypeStruct((N, F), q.dtype),
                   jax.ShapeDtypeStruct((N, 3 * F), mu.dtype)),
        grid_spec=pltpu.PrefetchScalarGridSpec(
            num_scalar_prefetch=0,
            grid=grid,
            in_specs=[
                pl.BlockSpec((tn, F), row),           # q
                pl.BlockSpec((tn, 3 * F), row),       # mu, (N, 3F) lane-concat view
                pl.BlockSpec((F, 2 * F), full),       # mu_channel_mix weight
                pl.BlockSpec((2 * F, F), full),       # intra_atomic_net layer-1 weight
                pl.BlockSpec((1, F), full),           # layer-1 bias
                pl.BlockSpec((F, 3 * F), full),       # layer-2 weight
                pl.BlockSpec((1, 3 * F), full),       # layer-2 bias
            ],
            out_specs=[
                pl.BlockSpec((tn, F), row),
                pl.BlockSpec((tn, 3 * F), row),
            ],
        ),
        compiler_params=pltpu.CompilerParams(
            dimension_semantics=("parallel",),
            vmem_limit_bytes=_VMEM_LIMIT_BYTES,
        ),
    )(q2, mu2, wmix, w1, b1, w2, b2)

    return q_out.reshape(N, 1, F), mu_out.reshape(N, 3, F)


def painn_mixing_reference(q, mu, wmix, w1, b1, w2, b2, epsilon, F):
    """Pure-JAX reference mirroring the PyTorch forward."""
    mu_mix = mu @ wmix                                               # (N, 3, 2F)
    mu_V, mu_W = mu_mix[..., :F], mu_mix[..., F:]
    mu_Vn = jnp.sqrt(jnp.sum(mu_V ** 2, axis=-2, keepdims=True) + epsilon)   # (N, 1, F)
    ctx = jnp.concatenate([q, mu_Vn], axis=-1)                       # (N, 1, 2F)
    h = ctx @ w1 + b1
    h = h * jax.nn.sigmoid(h)
    x = h @ w2 + b2                                                  # (N, 1, 3F)
    dq, dmu, dqmu = x[..., :F], x[..., F:2 * F], x[..., 2 * F:]
    dmu = dmu * mu_W
    dqmu = dqmu * jnp.sum(mu_V * mu_W, axis=1, keepdims=True)
    return q + dq + dqmu, mu + dmu


if __name__ == "__main__":
    EPS = 1e-8
    F = 32                                   # nr_atom_basis (small demo config)

    key = jax.random.PRNGKey(0)
    kq, kmu, k0, k1, k2, k3, k4, kq2, kmu2 = jax.random.split(key, 9)

    # Deterministic synthetic parameters (stored so that y = x @ W + b).
    wmix = jax.random.normal(k0, (F, 2 * F), jnp.float32) * (1.0 / np.sqrt(F))
    w1 = jax.random.normal(k1, (2 * F, F), jnp.float32) * (1.0 / np.sqrt(2 * F))
    b1 = jax.random.normal(k2, (1, F), jnp.float32) * 0.1
    w2 = jax.random.normal(k3, (F, 3 * F), jnp.float32) * (1.0 / np.sqrt(F))
    b2 = jax.random.normal(k4, (1, 3 * F), jnp.float32) * 0.1

    # --- even multi-tile case -----------------------------------------------------
    N = 16
    q = jax.random.normal(kq, (N, 1, F), jnp.float32)
    mu = jax.random.normal(kmu, (N, 3, F), jnp.float32)

    q_out, mu_out = painn_mixing(q, mu, wmix, w1, b1, w2, b2, epsilon=EPS)
    jax.block_until_ready((q_out, mu_out))

    q_ref, mu_ref = painn_mixing_reference(q, mu, wmix, w1, b1, w2, b2, EPS, F)
    np.testing.assert_allclose(np.asarray(q_out), np.asarray(q_ref), rtol=1e-5, atol=1e-4)
    np.testing.assert_allclose(np.asarray(mu_out), np.asarray(mu_ref), rtol=1e-5, atol=1e-4)

    # --- ragged atom count: multi-tile grid with a masked tail block (no padding) --
    Nr = 45
    qr = jax.random.normal(kq2, (Nr, 1, F), jnp.float32)
    mur = jax.random.normal(kmu2, (Nr, 3, F), jnp.float32)

    qr_out, mur_out = painn_mixing(qr, mur, wmix, w1, b1, w2, b2, epsilon=EPS)
    jax.block_until_ready((qr_out, mur_out))

    qr_ref, mur_ref = painn_mixing_reference(qr, mur, wmix, w1, b1, w2, b2, EPS, F)
    np.testing.assert_allclose(np.asarray(qr_out), np.asarray(qr_ref), rtol=1e-5, atol=1e-4)
    np.testing.assert_allclose(np.asarray(mur_out), np.asarray(mur_ref), rtol=1e-5, atol=1e-4)

    # --- bf16 storage path (halved HBM traffic; f32 accumulation in-kernel) --------
    bf = jnp.bfloat16
    qb_out, mub_out = painn_mixing(qr.astype(bf), mur.astype(bf),
                                   wmix.astype(bf), w1.astype(bf), b1.astype(bf),
                                   w2.astype(bf), b2.astype(bf), epsilon=EPS)
    jax.block_until_ready((qb_out, mub_out))

    qb_ref, mub_ref = painn_mixing_reference(
        qr.astype(bf).astype(jnp.float32), mur.astype(bf).astype(jnp.float32),
        wmix.astype(bf).astype(jnp.float32), w1.astype(bf).astype(jnp.float32),
        b1.astype(bf).astype(jnp.float32), w2.astype(bf).astype(jnp.float32),
        b2.astype(bf).astype(jnp.float32), EPS, F)
    np.testing.assert_allclose(np.asarray(qb_out.astype(jnp.float32)), np.asarray(qb_ref),
                               rtol=1e-1, atol=3e-1)
    np.testing.assert_allclose(np.asarray(mub_out.astype(jnp.float32)), np.asarray(mub_ref),
                               rtol=1e-1, atol=3e-1)

    print("KERNEL_OK")
</pallas_src>

<mosaic_0001>
module attributes {stable_mosaic.version = 11 : i64} {
  func.func @_mixing_kernel(%arg0: i32, %arg1: memref<8x32xf32, #tpu.memory_space<vmem>>, %arg2: memref<8x96xf32, #tpu.memory_space<vmem>>, %arg3: memref<32x64xf32, #tpu.memory_space<vmem>>, %arg4: memref<64x32xf32, #tpu.memory_space<vmem>>, %arg5: memref<1x32xf32, #tpu.memory_space<vmem>>, %arg6: memref<32x96xf32, #tpu.memory_space<vmem>>, %arg7: memref<1x96xf32, #tpu.memory_space<vmem>>, %arg8: memref<8x32xf32, #tpu.memory_space<vmem>>, %arg9: memref<8x96xf32, #tpu.memory_space<vmem>>) attributes {dimension_semantics = [#tpu.dimension_semantics<parallel>], iteration_bounds = array<i64: 2>, scalar_prefetch = 0 : i64, scratch_operands = 0 : i64, tpu.core_type = #tpu.core_type<tc>, window_params = [{transform_indices = @transform_0, window_bounds = array<i64: 8, 32>}, {transform_indices = @transform_1, window_bounds = array<i64: 8, 96>}, {pipeline_mode = #tpu.pipeline_mode<synchronous>, transform_indices = @transform_2, window_bounds = array<i64: 32, 64>}, {pipeline_mode = #tpu.pipeline_mode<synchronous>, transform_indices = @transform_3, window_bounds = array<i64: 64, 32>}, {pipeline_mode = #tpu.pipeline_mode<synchronous>, transform_indices = @transform_4, window_bounds = array<i64: 1, 32>}, {pipeline_mode = #tpu.pipeline_mode<synchronous>, transform_indices = @transform_5, window_bounds = array<i64: 32, 96>}, {pipeline_mode = #tpu.pipeline_mode<synchronous>, transform_indices = @transform_6, window_bounds = array<i64: 1, 96>}, {transform_indices = @transform_7, window_bounds = array<i64: 8, 32>}, {transform_indices = @transform_8, window_bounds = array<i64: 8, 96>}]} {
    %c0 = arith.constant 0 : index
    %c0_0 = arith.constant 0 : index
    %0 = vector.load %arg1[%c0, %c0_0] : memref<8x32xf32, #tpu.memory_space<vmem>>, vector<8x32xf32>
    %c0_1 = arith.constant 0 : index
    %c0_2 = arith.constant 0 : index
    %1 = vector.load %arg2[%c0_1, %c0_2] : memref<8x96xf32, #tpu.memory_space<vmem>>, vector<8x96xf32>
    %c0_3 = arith.constant 0 : index
    %c0_4 = arith.constant 0 : index
    %2 = vector.load %arg3[%c0_3, %c0_4] : memref<32x64xf32, #tpu.memory_space<vmem>>, vector<32x64xf32>
    %3 = vector.extract_strided_slice %1 {offsets = [0, 0], sizes = [8, 32], strides = [1, 1]} : vector<8x96xf32> to vector<8x32xf32>
    %cst = arith.constant dense<0.000000e+00> : vector<8x64xf32>
    %4 = tpu.matmul %3, %2, %cst {dimension_numbers = #tpu.dot_dimension_numbers<[1], [0], [0], [1], [0, 0, 1, 1], [], []>} : vector<8x32xf32>, vector<32x64xf32>, vector<8x64xf32> -> vector<8x64xf32>
    %5 = vector.extract_strided_slice %4 {offsets = [0, 0], sizes = [8, 32], strides = [1, 1]} : vector<8x64xf32> to vector<8x32xf32>
    %6 = vector.extract_strided_slice %4 {offsets = [0, 32], sizes = [8, 32], strides = [1, 1]} : vector<8x64xf32> to vector<8x32xf32>
    %7 = vector.extract_strided_slice %1 {offsets = [0, 32], sizes = [8, 32], strides = [1, 1]} : vector<8x96xf32> to vector<8x32xf32>
    %cst_5 = arith.constant dense<0.000000e+00> : vector<8x64xf32>
    %8 = tpu.matmul %7, %2, %cst_5 {dimension_numbers = #tpu.dot_dimension_numbers<[1], [0], [0], [1], [0, 0, 1, 1], [], []>} : vector<8x32xf32>, vector<32x64xf32>, vector<8x64xf32> -> vector<8x64xf32>
    %9 = vector.extract_strided_slice %8 {offsets = [0, 0], sizes = [8, 32], strides = [1, 1]} : vector<8x64xf32> to vector<8x32xf32>
    %10 = vector.extract_strided_slice %8 {offsets = [0, 32], sizes = [8, 32], strides = [1, 1]} : vector<8x64xf32> to vector<8x32xf32>
    %11 = vector.extract_strided_slice %1 {offsets = [0, 64], sizes = [8, 32], strides = [1, 1]} : vector<8x96xf32> to vector<8x32xf32>
    %cst_6 = arith.constant dense<0.000000e+00> : vector<8x64xf32>
    %12 = tpu.matmul %11, %2, %cst_6 {dimension_numbers = #tpu.dot_dimension_numbers<[1], [0], [0], [1], [0, 0, 1, 1], [], []>} : vector<8x32xf32>, vector<32x64xf32>, vector<8x64xf32> -> vector<8x64xf32>
    %13 = vector.extract_strided_slice %12 {offsets = [0, 0], sizes = [8, 32], strides = [1, 1]} : vector<8x64xf32> to vector<8x32xf32>
    %14 = vector.extract_strided_slice %12 {offsets = [0, 32], sizes = [8, 32], strides = [1, 1]} : vector<8x64xf32> to vector<8x32xf32>
    %15 = arith.mulf %5, %5 : vector<8x32xf32>
    %16 = arith.mulf %9, %9 : vector<8x32xf32>
    %17 = arith.addf %15, %16 : vector<8x32xf32>
    %18 = arith.mulf %13, %13 : vector<8x32xf32>
    %19 = arith.addf %17, %18 : vector<8x32xf32>
    %cst_7 = arith.constant 9.99999993E-9 : f32
    %20 = vector.broadcast %cst_7 : f32 to vector<8x32xf32>
    %21 = arith.addf %19, %20 : vector<8x32xf32>
    %22 = math.sqrt %21 : vector<8x32xf32>
    %c0_8 = arith.constant 0 : index
    %c0_9 = arith.constant 0 : index
    %23 = vector.load %arg4[%c0_8, %c0_9] : memref<64x32xf32, #tpu.memory_space<vmem>>, vector<32x32xf32>
    %cst_10 = arith.constant dense<0.000000e+00> : vector<8x32xf32>
    %24 = tpu.matmul %0, %23, %cst_10 {dimension_numbers = #tpu.dot_dimension_numbers<[1], [0], [0], [1], [0, 0, 1, 1], [], []>} : vector<8x32xf32>, vector<32x32xf32>, vector<8x32xf32> -> vector<8x32xf32>
    %c32 = arith.constant 32 : index
    %c0_11 = arith.constant 0 : index
    %25 = vector.load %arg4[%c32, %c0_11] : memref<64x32xf32, #tpu.memory_space<vmem>>, vector<32x32xf32>
    %cst_12 = arith.constant dense<0.000000e+00> : vector<8x32xf32>
    %26 = tpu.matmul %22, %25, %cst_12 {dimension_numbers = #tpu.dot_dimension_numbers<[1], [0], [0], [1], [0, 0, 1, 1], [], []>} : vector<8x32xf32>, vector<32x32xf32>, vector<8x32xf32> -> vector<8x32xf32>
    %27 = arith.addf %24, %26 : vector<8x32xf32>
    %c0_13 = arith.constant 0 : index
    %c0_14 = arith.constant 0 : index
    %28 = vector.load %arg5[%c0_13, %c0_14] : memref<1x32xf32, #tpu.memory_space<vmem>>, vector<1x32xf32>
    %29 = vector.broadcast %28 : vector<1x32xf32> to vector<8x32xf32>
    %30 = arith.addf %27, %29 : vector<8x32xf32>
    %31 = arith.negf %30 : vector<8x32xf32>
    %32 = math.exp %31 : vector<8x32xf32>
    %cst_15 = arith.constant 1.000000e+00 : f32
    %33 = vector.broadcast %cst_15 : f32 to vector<8x32xf32>
    %34 = arith.addf %33, %32 : vector<8x32xf32>
    %35 = arith.divf %33, %34 : vector<8x32xf32>
    %36 = arith.mulf %30, %35 : vector<8x32xf32>
    %c0_16 = arith.constant 0 : index
    %c0_17 = arith.constant 0 : index
    %37 = vector.load %arg6[%c0_16, %c0_17] : memref<32x96xf32, #tpu.memory_space<vmem>>, vector<32x96xf32>
    %cst_18 = arith.constant dense<0.000000e+00> : vector<8x96xf32>
    %38 = tpu.matmul %36, %37, %cst_18 {dimension_numbers = #tpu.dot_dimension_numbers<[1], [0], [0], [1], [0, 0, 1, 1], [], []>} : vector<8x32xf32>, vector<32x96xf32>, vector<8x96xf32> -> vector<8x96xf32>
    %c0_19 = arith.constant 0 : index
    %c0_20 = arith.constant 0 : index
    %39 = vector.load %arg7[%c0_19, %c0_20] : memref<1x96xf32, #tpu.memory_space<vmem>>, vector<1x96xf32>
    %40 = vector.broadcast %39 : vector<1x96xf32> to vector<8x96xf32>
    %41 = arith.addf %38, %40 : vector<8x96xf32>
    %42 = vector.extract_strided_slice %41 {offsets = [0, 0], sizes = [8, 32], strides = [1, 1]} : vector<8x96xf32> to vector<8x32xf32>
    %43 = vector.extract_strided_slice %41 {offsets = [0, 32], sizes = [8, 32], strides = [1, 1]} : vector<8x96xf32> to vector<8x32xf32>
    %44 = vector.extract_strided_slice %41 {offsets = [0, 64], sizes = [8, 32], strides = [1, 1]} : vector<8x96xf32> to vector<8x32xf32>
    %45 = arith.mulf %5, %6 : vector<8x32xf32>
    %46 = arith.mulf %9, %10 : vector<8x32xf32>
    %47 = arith.addf %45, %46 : vector<8x32xf32>
    %48 = arith.mulf %13, %14 : vector<8x32xf32>
    %49 = arith.addf %47, %48 : vector<8x32xf32>
    %50 = arith.addf %0, %42 : vector<8x32xf32>
    %51 = arith.mulf %44, %49 : vector<8x32xf32>
    %52 = arith.addf %50, %51 : vector<8x32xf32>
    %c0_21 = arith.constant 0 : index
    %c0_22 = arith.constant 0 : index
    %53 = vector.load %arg8[%c0_21, %c0_22] : memref<8x32xf32, #tpu.memory_space<vmem>>, vector<8x32xf32>
    tpu.vector_store %arg8[%c0_21, %c0_22], %52 {strides = array<i32>} : memref<8x32xf32, #tpu.memory_space<vmem>>, vector<8x32xf32>,
    %54 = vector.extract_strided_slice %1 {offsets = [0, 0], sizes = [8, 32], strides = [1, 1]} : vector<8x96xf32> to vector<8x32xf32>
    %55 = arith.mulf %43, %6 : vector<8x32xf32>
    %56 = arith.addf %54, %55 : vector<8x32xf32>
    %c0_23 = arith.constant 0 : index
    %c0_24 = arith.constant 0 : index
    %57 = vector.load %arg9[%c0_23, %c0_24] : memref<8x96xf32, #tpu.memory_space<vmem>>, vector<8x32xf32>
    tpu.vector_store %arg9[%c0_23, %c0_24], %56 {strides = array<i32>} : memref<8x96xf32, #tpu.memory_space<vmem>>, vector<8x32xf32>,
    %58 = vector.extract_strided_slice %1 {offsets = [0, 32], sizes = [8, 32], strides = [1, 1]} : vector<8x96xf32> to vector<8x32xf32>
    %59 = arith.mulf %43, %10 : vector<8x32xf32>
    %60 = arith.addf %58, %59 : vector<8x32xf32>
    %c0_25 = arith.constant 0 : index
    %c32_26 = arith.constant 32 : index
    %61 = vector.load %arg9[%c0_25, %c32_26] : memref<8x96xf32, #tpu.memory_space<vmem>>, vector<8x32xf32>
    tpu.vector_store %arg9[%c0_25, %c32_26], %60 {strides = array<i32>} : memref<8x96xf32, #tpu.memory_space<vmem>>, vector<8x32xf32>,
    %62 = vector.extract_strided_slice %1 {offsets = [0, 64], sizes = [8, 32], strides = [1, 1]} : vector<8x96xf32> to vector<8x32xf32>
    %63 = arith.mulf %43, %14 : vector<8x32xf32>
    %64 = arith.addf %62, %63 : vector<8x32xf32>
    %c0_27 = arith.constant 0 : index
    %c64 = arith.constant 64 : index
    %65 = vector.load %arg9[%c0_27, %c64] : memref<8x96xf32, #tpu.memory_space<vmem>>, vector<8x32xf32>
    tpu.vector_store %arg9[%c0_27, %c64], %64 {strides = array<i32>} : memref<8x96xf32, #tpu.memory_space<vmem>>, vector<8x32xf32>,
    return
  }
  func.func @transform_0(%arg0: i32) -> (i32, i32) {
    %c0_i32 = arith.constant 0 : i32
    %c0_i32_0 = arith.constant 0 : i32
    return %arg0, %c0_i32 : i32, i32
  }
  func.func @transform_1(%arg0: i32) -> (i32, i32) {
    %c0_i32 = arith.constant 0 : i32
    %c0_i32_0 = arith.constant 0 : i32
    return %arg0, %c0_i32 : i32, i32
  }
  func.func @transform_2(%arg0: i32) -> (i32, i32) {
    %c0_i32 = arith.constant 0 : i32
    %c0_i32_0 = arith.constant 0 : i32
    %c0_i32_1 = arith.constant 0 : i32
    return %c0_i32, %c0_i32_0 : i32, i32
  }
  func.func @transform_3(%arg0: i32) -> (i32, i32) {
    %c0_i32 = arith.constant 0 : i32
    %c0_i32_0 = arith.constant 0 : i32
    %c0_i32_1 = arith.constant 0 : i32
    return %c0_i32, %c0_i32_0 : i32, i32
  }
  func.func @transform_4(%arg0: i32) -> (i32, i32) {
    %c0_i32 = arith.constant 0 : i32
    %c0_i32_0 = arith.constant 0 : i32
    %c0_i32_1 = arith.constant 0 : i32
    return %c0_i32, %c0_i32_0 : i32, i32
  }
  func.func @transform_5(%arg0: i32) -> (i32, i32) {
    %c0_i32 = arith.constant 0 : i32
    %c0_i32_0 = arith.constant 0 : i32
    %c0_i32_1 = arith.constant 0 : i32
    return %c0_i32, %c0_i32_0 : i32, i32
  }
  func.func @transform_6(%arg0: i32) -> (i32, i32) {
    %c0_i32 = arith.constant 0 : i32
    %c0_i32_0 = arith.constant 0 : i32
    %c0_i32_1 = arith.constant 0 : i32
    return %c0_i32, %c0_i32_0 : i32, i32
  }
  func.func @transform_7(%arg0: i32) -> (i32, i32) {
    %c0_i32 = arith.constant 0 : i32
    %c0_i32_0 = arith.constant 0 : i32
    return %arg0, %c0_i32 : i32, i32
  }
  func.func @transform_8(%arg0: i32) -> (i32, i32) {
    %c0_i32 = arith.constant 0 : i32
    %c0_i32_0 = arith.constant 0 : i32
    return %arg0, %c0_i32 : i32, i32
  }
}

</mosaic_0001>

<llo_original>
// kernel: tpu_custom_call.1
$region0: #{tpu_custom_call.1}
  #allocation0 [shape = 'u32[]', space=smem, size = 0x4, offset = 0x4, fixed_abs, tag = 'smem constant byte address 0x4 - core index']
  #allocation1 [shape = 'u32[144,128]{1,0:T(1,128)}', space=vmem, size = 0x12000, scoped, tag = 'internal scratch']
  %s0 = inlined_call_operand.vmem [shape: f32[16,32], index: 0, kind: input, shape index: {}]
  %s1 = inlined_call_operand.vmem [shape: f32[16,96], index: 1, kind: input, shape index: {}]
  %s2 = inlined_call_operand.vmem [shape: f32[32,64], index: 2, kind: input, shape index: {}]
  %s3 = inlined_call_operand.vmem [shape: f32[64,32], index: 3, kind: input, shape index: {}]
  %s4 = inlined_call_operand.vmem [shape: f32[1,32], index: 4, kind: input, shape index: {}]
  %s5 = inlined_call_operand.vmem [shape: f32[32,96], index: 5, kind: input, shape index: {}]
  %s6 = inlined_call_operand.vmem [shape: f32[1,96], index: 6, kind: input, shape index: {}]
  %s7 = inlined_call_operand.hbm [shape: f32[16,32], index: 7, kind: output, shape index: {0}]
  %s8 = inlined_call_operand.hbm [shape: f32[16,96], index: 8, kind: output, shape index: {1}]
  %9 = xla_tuple %s7, %s8
  %s10 = sld [smem:[#allocation0]]
  $region69: #{tpu_custom_call.1} parent=0
    _
  %s12 = ssub.s32 1, %s10
  %s13 = scalar_select 0, %s12, %s10
  $region1: #{tpu_custom_call.1} parent=0
    #allocation2 [shape = 'u8[8192]{0}', space=vmem, size = 0x2000, scoped, tag = 'output window, operand 0']
    #allocation3 [shape = 's32[2]{0}', space=sflag, size = 0x8, scoped, tag = 'scoped memory for tpu_custom_call.1']
    #allocation4 [shape = 'u8[8192]{0}', space=vmem, size = 0x2000, scoped, tag = 'output window, operand 1']
    #allocation5 [shape = 's32[2]{0}', space=sflag, size = 0x8, scoped, tag = 'scoped memory for tpu_custom_call.1']
    %14 = vsyncpa [#allocation3], 0
    %s15 = scalar_lea.sflag [#allocation3], 1
    %16 = vsyncpa %s15, 0
    %17 = vsyncpa [#allocation5], 0
    %s18 = scalar_lea.sflag [#allocation5], 1
    %19 = vsyncpa %s18, 0
    loop: start=0, step=1, limit=4
    $region2: #{tpu_custom_call.1} parent=1 // loop_pre_header
      _
    $region3: #{tpu_custom_call.1} parent=1 // loop_header
      %s21 = sphi 0, %s25
      %p22 = scmp.ge.s32.totalorder %s21, 4
      %s31 = sphi 0, %s33
      %s34 = sphi 0, %s31
      %s35 = sphi 0, %s34
      %s51 = sphi 0, %s35
      %s57 = sphi 0, %s59
      %s60 = sphi 0, %s57
      %s61 = sphi 0, %s60
      %s77 = sphi 0, %s61
      %s81 = sphi 0, %s81
      %s83 = sphi 0, %s81
      %s84 = sphi 0, %s83
      %s98 = sphi 0, %s84
      %s102 = sphi 0, %s102
      %s104 = sphi 0, %s102
      %s105 = sphi 0, %s104
      %s119 = sphi 0, %s105
      %s123 = sphi 0, %s123
      %s125 = sphi 0, %s123
      %s126 = sphi 0, %s125
      %s140 = sphi 0, %s126
      %s144 = sphi 0, %s144
      %s146 = sphi 0, %s144
      %s147 = sphi 0, %s146
      %s161 = sphi 0, %s147
      %s165 = sphi 0, %s165
      %s167 = sphi 0, %s165
      %s168 = sphi 0, %s167
      %s182 = sphi 0, %s168
      %s188 = sphi 0, %s190
      %s191 = sphi 0, %s188
      %s192 = sphi 0, %s191
      %s208 = sphi 0, %s192
      %s214 = sphi 0, %s216
      %s217 = sphi 0, %s214
      %s218 = sphi 0, %s217
      %s234 = sphi 0, %s218
    $region4: #{tpu_custom_call.1} parent=1 // loop_header_branch
      %24 = sbr.rel (%p22) target = $region8
    $region5: #{tpu_custom_call.1} parent=1 // loop_body
      %s26 = ssub.s32 %s21, 1
      %s27 = ssub.s32 %s21, 2
      %s28 = sadd.s32 %s21, 1
      %s29 = ssub.s32 %s21, %s28
      %p30 = scmp.eq.s32.totalorder %s29, 0
      %s32 = sadd.s32 %s31, 1
      %s33 = scalar_select %p30, %s31, %s32
      %p36 = pneg %p30
      %p37 = scmp.eq.s32.totalorder %s21, 1
      %p38 = por %p36, %p37
      %p39 = scmp.ne.s32.totalorder %s31, %s34
      %p40 = scmp.eq.s32.totalorder %s21, 0
      %p41 = por %p39, %p40
      %p42 = scmp.ne.s32.totalorder %s31, %s34
      %p43 = scmp.eq.s32.totalorder %s26, 1
      %p44 = por %p42, %p43
      %p45 = scmp.ne.s32.totalorder %s34, %s35
      %p46 = scmp.eq.s32.totalorder %s26, 0
      %p47 = por %p45, %p46
      %p48 = scmp.ne.s32.totalorder %s34, %s35
      %p49 = scmp.eq.s32.totalorder %s27, 1
      %p50 = por %p48, %p49
      %p52 = scmp.ne.s32.totalorder %s35, %s51
      %p53 = scmp.eq.s32.totalorder %s27, 0
      %p54 = por %p52, %p53
      %s55 = ssub.s32 %s21, %s28
      %p56 = scmp.eq.s32.totalorder %s55, 0
      %s58 = sadd.s32 %s57, 1
      %s59 = scalar_select %p56, %s57, %s58
      %p62 = pneg %p56
      %p63 = scmp.eq.s32.totalorder %s21, 1
      %p64 = por %p62, %p63
      %p65 = scmp.ne.s32.totalorder %s57, %s60
      %p66 = scmp.eq.s32.totalorder %s21, 0
      %p67 = por %p65, %p66
      %p68 = scmp.ne.s32.totalorder %s57, %s60
      %p69 = scmp.eq.s32.totalorder %s26, 1
      %p70 = por %p68, %p69
      %p71 = scmp.ne.s32.totalorder %s60, %s61
      %p72 = scmp.eq.s32.totalorder %s26, 0
      %p73 = por %p71, %p72
      %p74 = scmp.ne.s32.totalorder %s60, %s61
      %p75 = scmp.eq.s32.totalorder %s27, 1
      %p76 = por %p74, %p75
      %p78 = scmp.ne.s32.totalorder %s61, %s77
      %p79 = scmp.eq.s32.totalorder %s27, 0
      %p80 = por %p78, %p79
      %s82 = sadd.s32 %s81, 1
      %p85 = scmp.eq.s32.totalorder %s21, 1
      %p86 = scmp.ne.s32.totalorder %s81, %s83
      %p87 = scmp.eq.s32.totalorder %s21, 0
      %p88 = por %p86, %p87
      %p89 = scmp.ne.s32.totalorder %s81, %s83
      %p90 = scmp.eq.s32.totalorder %s26, 1
      %p91 = por %p89, %p90
      %p92 = scmp.ne.s32.totalorder %s83, %s84
      %p93 = scmp.eq.s32.totalorder %s26, 0
      %p94 = por %p92, %p93
      %p95 = scmp.ne.s32.totalorder %s83, %s84
      %p96 = scmp.eq.s32.totalorder %s27, 1
      %p97 = por %p95, %p96
      %p99 = scmp.ne.s32.totalorder %s84, %s98
      %p100 = scmp.eq.s32.totalorder %s27, 0
      %p101 = por %p99, %p100
      %s103 = sadd.s32 %s102, 1
      %p106 = scmp.eq.s32.totalorder %s21, 1
      %p107 = scmp.ne.s32.totalorder %s102, %s104
      %p108 = scmp.eq.s32.totalorder %s21, 0
      %p109 = por %p107, %p108
      %p110 = scmp.ne.s32.totalorder %s102, %s104
      %p111 = scmp.eq.s32.totalorder %s26, 1
      %p112 = por %p110, %p111
      %p113 = scmp.ne.s32.totalorder %s104, %s105
      %p114 = scmp.eq.s32.totalorder %s26, 0
      %p115 = por %p113, %p114
      %p116 = scmp.ne.s32.totalorder %s104, %s105
      %p117 = scmp.eq.s32.totalorder %s27, 1
      %p118 = por %p116, %p117
      %p120 = scmp.ne.s32.totalorder %s105, %s119
      %p121 = scmp.eq.s32.totalorder %s27, 0
      %p122 = por %p120, %p121
      %s124 = sadd.s32 %s123, 1
      %p127 = scmp.eq.s32.totalorder %s21, 1
      %p128 = scmp.ne.s32.totalorder %s123, %s125
      %p129 = scmp.eq.s32.totalorder %s21, 0
      %p130 = por %p128, %p129
      %p131 = scmp.ne.s32.totalorder %s123, %s125
      %p132 = scmp.eq.s32.totalorder %s26, 1
      %p133 = por %p131, %p132
      %p134 = scmp.ne.s32.totalorder %s125, %s126
      %p135 = scmp.eq.s32.totalorder %s26, 0
      %p136 = por %p134, %p135
      %p137 = scmp.ne.s32.totalorder %s125, %s126
      %p138 = scmp.eq.s32.totalorder %s27, 1
      %p139 = por %p137, %p138
      %p141 = scmp.ne.s32.totalorder %s126, %s140
      %p142 = scmp.eq.s32.totalorder %s27, 0
      %p143 = por %p141, %p142
      %s145 = sadd.s32 %s144, 1
      %p148 = scmp.eq.s32.totalorder %s21, 1
      %p149 = scmp.ne.s32.totalorder %s144, %s146
      %p150 = scmp.eq.s32.totalorder %s21, 0
      %p151 = por %p149, %p150
      %p152 = scmp.ne.s32.totalorder %s144, %s146
      %p153 = scmp.eq.s32.totalorder %s26, 1
      %p154 = por %p152, %p153
      %p155 = scmp.ne.s32.totalorder %s146, %s147
      %p156 = scmp.eq.s32.totalorder %s26, 0
      %p157 = por %p155, %p156
      %p158 = scmp.ne.s32.totalorder %s146, %s147
      %p159 = scmp.eq.s32.totalorder %s27, 1
      %p160 = por %p158, %p159
      %p162 = scmp.ne.s32.totalorder %s147, %s161
      %p163 = scmp.eq.s32.totalorder %s27, 0
      %p164 = por %p162, %p163
      %s166 = sadd.s32 %s165, 1
      %p169 = scmp.eq.s32.totalorder %s21, 1
      %p170 = scmp.ne.s32.totalorder %s165, %s167
      %p171 = scmp.eq.s32.totalorder %s21, 0
      %p172 = por %p170, %p171
      %p173 = scmp.ne.s32.totalorder %s165, %s167
      %p174 = scmp.eq.s32.totalorder %s26, 1
      %p175 = por %p173, %p174
      %p176 = scmp.ne.s32.totalorder %s167, %s168
      %p177 = scmp.eq.s32.totalorder %s26, 0
      %p178 = por %p176, %p177
      %p179 = scmp.ne.s32.totalorder %s167, %s168
      %p180 = scmp.eq.s32.totalorder %s27, 1
      %p181 = por %p179, %p180
      %p183 = scmp.ne.s32.totalorder %s168, %s182
      %p184 = scmp.eq.s32.totalorder %s27, 0
      %p185 = por %p183, %p184
      %s186 = ssub.s32 %s21, %s28
      %p187 = scmp.eq.s32.totalorder %s186, 0
      %s189 = sadd.s32 %s188, 1
      %s190 = scalar_select %p187, %s188, %s189
      %p193 = pneg %p187
      %p194 = scmp.eq.s32.totalorder %s21, 1
      %p195 = por %p193, %p194
      %p196 = scmp.ne.s32.totalorder %s188, %s191
      %p197 = scmp.eq.s32.totalorder %s21, 0
      %p198 = por %p196, %p197
      %p199 = scmp.ne.s32.totalorder %s188, %s191
      %p200 = scmp.eq.s32.totalorder %s26, 1
      %p201 = por %p199, %p200
      %p202 = scmp.ne.s32.totalorder %s191, %s192
      %p203 = scmp.eq.s32.totalorder %s26, 0
      %p204 = por %p202, %p203
      %p205 = scmp.ne.s32.totalorder %s191, %s192
      %p206 = scmp.eq.s32.totalorder %s27, 1
      %p207 = por %p205, %p206
      %p209 = scmp.ne.s32.totalorder %s192, %s208
      %p210 = scmp.eq.s32.totalorder %s27, 0
      %p211 = por %p209, %p210
      %s212 = ssub.s32 %s21, %s28
      %p213 = scmp.eq.s32.totalorder %s212, 0
      %s215 = sadd.s32 %s214, 1
      %s216 = scalar_select %p213, %s214, %s215
      %p219 = pneg %p213
      %p220 = scmp.eq.s32.totalorder %s21, 1
      %p221 = por %p219, %p220
      %p222 = scmp.ne.s32.totalorder %s214, %s217
      %p223 = scmp.eq.s32.totalorder %s21, 0
      %p224 = por %p222, %p223
      %p225 = scmp.ne.s32.totalorder %s214, %s217
      %p226 = scmp.eq.s32.totalorder %s26, 1
      %p227 = por %p225, %p226
      %p228 = scmp.ne.s32.totalorder %s217, %s218
      %p229 = scmp.eq.s32.totalorder %s26, 0
      %p230 = por %p228, %p229
      %p231 = scmp.ne.s32.totalorder %s217, %s218
      %p232 = scmp.eq.s32.totalorder %s27, 1
      %p233 = por %p231, %p232
      %p235 = scmp.ne.s32.totalorder %s218, %s234
      %p236 = scmp.eq.s32.totalorder %s27, 0
      %p237 = por %p235, %p236
      %p238 = scmp.le.s32.totalorder 1, %s21
      %p239 = scmp.lt.s32.totalorder %s21, 3
      %p240 = pnand %p238, %p239
      %p241 = pneg %p240
      // Predicated region
      $region9: #{tpu_custom_call.1} parent=5 // pred_check
        _
      $region10: #{tpu_custom_call.1} parent=5 // pred_check_branch
        %243 = sbr.rel (%p240) target = $region12
      $region11: #{tpu_custom_call.1} parent=5 // pred_region
        %s244 = ssub.s32 %s21, 1
        // Predicated region
        $region13: #{tpu_custom_call.1} parent=11 // pred_check
          %p245 = pneg %p94
        $region14: #{tpu_custom_call.1} parent=11 // pred_check_branch
          %247 = sbr.rel (%p245) target = $region16
        $region15: #{tpu_custom_call.1} parent=11 // pred_region
          _
        $region16: #{tpu_custom_call.1} parent=11 // pred_fallthru
          _
        // Predicated region
        $region17: #{tpu_custom_call.1} parent=11 // pred_check
          %p248 = pneg %p115
        $region18: #{tpu_custom_call.1} parent=11 // pred_check_branch
          %250 = sbr.rel (%p248) target = $region20
        $region19: #{tpu_custom_call.1} parent=11 // pred_region
          _
        $region20: #{tpu_custom_call.1} parent=11 // pred_fallthru
          _
        // Predicated region
        $region21: #{tpu_custom_call.1} parent=11 // pred_check
          %p251 = pneg %p136
        $region22: #{tpu_custom_call.1} parent=11 // pred_check_branch
          %253 = sbr.rel (%p251) target = $region24
        $region23: #{tpu_custom_call.1} parent=11 // pred_region
          _
        $region24: #{tpu_custom_call.1} parent=11 // pred_fallthru
          _
        // Predicated region
        $region25: #{tpu_custom_call.1} parent=11 // pred_check
          %p254 = pneg %p157
        $region26: #{tpu_custom_call.1} parent=11 // pred_check_branch
          %256 = sbr.rel (%p254) target = $region28
        $region27: #{tpu_custom_call.1} parent=11 // pred_region
          _
        $region28: #{tpu_custom_call.1} parent=11 // pred_fallthru
          _
        // Predicated region
        $region29: #{tpu_custom_call.1} parent=11 // pred_check
          %p257 = pneg %p178
        $region30: #{tpu_custom_call.1} parent=11 // pred_check_branch
          %259 = sbr.rel (%p257) target = $region32
        $region31: #{tpu_custom_call.1} parent=11 // pred_region
          _
        $region32: #{tpu_custom_call.1} parent=11 // pred_fallthru
          _
      $region12: #{tpu_custom_call.1} parent=5 // pred_fallthru
        _
      %p260 = scmp.lt.s32.totalorder %s21, 2
      // Predicated region
      $region33: #{tpu_custom_call.1} parent=5 // pred_check
        %p261 = pneg %p260
      $region34: #{tpu_custom_call.1} parent=5 // pred_check_branch
        %263 = sbr.rel (%p261) target = $region36
      $region35: #{tpu_custom_call.1} parent=5 // pred_region
        // Predicated region
        $region37: #{tpu_custom_call.1} parent=35 // pred_check
          %p264 = pneg %p41
        $region38: #{tpu_custom_call.1} parent=35 // pred_check_branch
          %266 = sbr.rel (%p264) target = $region40
        $region39: #{tpu_custom_call.1} parent=35 // pred_region
          %p267 = scmp.lt.s32.totalorder %s21, 1
          %s268 = scalar_select %p267, %s21, 1
          %s269 = smul.addr %s268, 8
          %s270 = scalar_lea.vmem %s0, %s269
        $region40: #{tpu_custom_call.1} parent=35 // pred_fallthru
          _
        // Predicated region
        $region41: #{tpu_custom_call.1} parent=35 // pred_check
          %p271 = pneg %p67
        $region42: #{tpu_custom_call.1} parent=35 // pred_check_branch
          %273 = sbr.rel (%p271) target = $region44
        $region43: #{tpu_custom_call.1} parent=35 // pred_region
          %p274 = scmp.lt.s32.totalorder %s21, 1
          %s275 = scalar_select %p274, %s21, 1
          %s276 = smul.addr %s275, 8
          %s277 = scalar_lea.vmem %s1, %s276
        $region44: #{tpu_custom_call.1} parent=35 // pred_fallthru
          _
      $region36: #{tpu_custom_call.1} parent=5 // pred_fallthru
        _
      %p278 = scmp.le.s32.totalorder 1, %s21
      %p279 = scmp.lt.s32.totalorder %s21, 3
      %p280 = pnand %p278, %p279
      %p281 = pneg %p280
      // Predicated region
      $region45: #{tpu_custom_call.1} parent=5 // pred_check
        _
      $region46: #{tpu_custom_call.1} parent=5 // pred_check_branch
        %283 = sbr.rel (%p280) target = $region48
      $region47: #{tpu_custom_call.1} parent=5 // pred_region
        %s284 = ssub.s32 %s21, 1
        %p285 = scmp.lt.s32.totalorder %s26, 1
        %s286 = scalar_select %p285, %s26, 1
        %s287 = smul.addr %s286, 8
        %s288 = scalar_lea.vmem %s0, %s287
        %p289 = pneg %p47
        %p290 = pneg %p44
        %p291 = scmp.lt.s32.totalorder %s26, 1
        %s292 = scalar_select %p291, %s26, 1
        %s293 = smul.addr %s292, 8
        %s294 = scalar_lea.vmem %s1, %s293
        %p295 = pneg %p73
        %p296 = pneg %p70
        %p297 = pneg %p94
        %p298 = pneg %p91
        %p299 = pneg %p115
        %p300 = pneg %p112
        %p301 = pneg %p136
        %p302 = pneg %p133
        %p303 = pneg %p157
        %p304 = pneg %p154
        %p305 = pneg %p178
        %p306 = pneg %p175
        %p307 = pneg %p204
        %p308 = pneg %p201
        %s309 = sand.u32 %s191, 1
        %s310 = scalar_lea.sflag [#allocation3], %s309
        %s311 = sand.u32 %s191, 1
        %s312 = smul.addr %s311, 8
        %s313 = scalar_lea.vmem [#allocation2], %s312
        %p314 = pneg %p230
        %p315 = pneg %p227
        %s316 = sand.u32 %s217, 1
        %s317 = scalar_lea.sflag [#allocation5], %s316
        %s318 = sand.u32 %s217, 1
        %s319 = smul.addr %s318, 8
        %s320 = scalar_lea.vmem [#allocation4], %s319
        %p321 = scmp.lt.s32.totalorder %s26, 1
        %s322 = scalar_select %p321, %s26, 1
        %s323 = smul.addr %s322, 8
        %s324 = scalar_lea.vmem %s0, %s323
        %p325 = scmp.lt.s32.totalorder %s26, 1
        %s326 = scalar_select %p325, %s26, 1
        %s327 = smul.addr %s326, 8
        %s328 = scalar_lea.vmem %s1, %s327
        %v329 = vld [vmem:[%s324] sm:$0xff]
        %v330 = vld [vmem:[%s328] sm:$0xff]
        %v331 = vld [vmem:[%s2] sm:$0xff]
        %v332 = vld [vmem:[%s2 + $0x8] sm:$0xff]
        %v333 = vld [vmem:[%s2 + $0x10] sm:$0xff]
        %v334 = vld [vmem:[%s2 + $0x18] sm:$0xff]
        %vm335 = vcmask 261120
        %v337 = vsel %vm335, %v330, 0
        %339 = vmatprep.subr.mxu0 0.0
        %340 = vmatpush1.msra.mxu0 %v331
        %341 = vmatprep.subr.mxu0 0.0
        %342 = vmatpush1.msra.mxu0 %v332
        %343 = vmatprep.subr.mxu0 0.0
        %344 = vmatpush1.msra.mxu0 %v333
        %345 = vmatprep.subr.mxu0 0.0
        %346 = vmatpush1.msra.mxu0 %v334
        %347 = vmatprep.subr.mxu0 0.0
        %348 = vmatpush1.msra.mxu0 0.0
        %349 = vmatprep.subr.mxu0 0.0
        %350 = vmatpush1.msra.mxu0 0.0
        %351 = vmatprep.subr.mxu0 0.0
        %352 = vmatpush1.msra.mxu0 0.0
        %353 = vmatprep.subr.mxu0 0.0
        %354 = vmatpush1.msra.mxu0 0.0
        %355 = vmatprep.subr.mxu0 0.0
        %356 = vmatpush1.msra.mxu0 0.0
        %357 = vmatprep.subr.mxu0 0.0
        %358 = vmatpush1.msra.mxu0 0.0
        %359 = vmatprep.subr.mxu0 0.0
        %360 = vmatpush1.msra.mxu0 0.0
        %361 = vmatprep.subr.mxu0 0.0
        %362 = vmatpush1.msra.mxu0 0.0
        %363 = vmatprep.subr.mxu0 0.0
        %364 = vmatpush1.msra.mxu0 0.0
        %365 = vmatprep.subr.mxu0 0.0
        %366 = vmatpush1.msra.mxu0 0.0
        %367 = vmatprep.subr.mxu0 0.0
        %368 = vmatpush1.msra.mxu0 0.0
        %369 = vmatprep.subr.mxu0 0.0
        %370 = vmatpush1.msra.mxu0 0.0
        %371 = vmatprep.subr.mxu0 0.0
        %372 = vmatpush1.msra.mxu0 0.0
        %373 = vmatprep.subr.mxu0 0.0
        %374 = vmatpush1.msra.mxu0 0.0
        %375 = vmatprep.subr.mxu0 0.0
        %376 = vmatpush1.msra.mxu0 0.0
        %377 = vmatprep.subr.mxu0 0.0
        %378 = vmatpush1.msra.mxu0 0.0
        %379 = vmatprep.subr.mxu0 0.0
        %380 = vmatpush1.msra.mxu0 0.0
        %381 = vmatprep.subr.mxu0 0.0
        %382 = vmatpush1.msra.mxu0 0.0
        %383 = vmatprep.subr.mxu0 0.0
        %384 = vmatpush1.msra.mxu0 0.0
        %385 = vmatprep.subr.mxu0 0.0
        %386 = vmatpush1.msra.mxu0 0.0
        %387 = vmatprep.subr.mxu0 0.0
        %388 = vmatpush1.msra.mxu0 0.0
        %389 = vmatprep.subr.mxu0 0.0
        %390 = vmatpush1.msra.mxu0 0.0
        %391 = vmatprep.subr.mxu0 0.0
        %392 = vmatpush1.msra.mxu0 0.0
        %393 = vmatprep.subr.mxu0 0.0
        %394 = vmatpush1.msra.mxu0 0.0
        %395 = vmatprep.subr.mxu0 0.0
        %396 = vmatpush1.msra.mxu0 0.0
        %397 = vmatprep.subr.mxu0 0.0
        %398 = vmatpush1.msra.mxu0 0.0
        %399 = vmatprep.subr.mxu0 0.0
        %400 = vmatpush1.msra.mxu0 0.0
        %401 = vmatprep.subr.mxu0 0.0
        %402 = vmatpush1.msra.mxu0 0.0
        %403 = vmatprep.mubr.f32.mxu0 0.0
        %404 = vmatmul.mubr.f32.gmra.mrb[0].mxu0 %v337
        %v405 = vpop.f32.mrb[0].mxu0
        %v406 = vadd.f32 0.0, %v405
        %v407 = vpop.f32.mrb[0].mxu0
        %408 = vdwg.mxu0
        %409 = vrot.lane.b32.xlu0 %v330, 96
        %v410 = vpop.permute.xlu0 %409
        %v411 = vsel %vm335, %v410, 0
        %413 = vmatprep.subr.mxu0 0.0
        %414 = vmatpush1.msra.mxu0 %v331
        %415 = vmatprep.subr.mxu0 0.0
        %416 = vmatpush1.msra.mxu0 %v332
        %417 = vmatprep.subr.mxu0 0.0
        %418 = vmatpush1.msra.mxu0 %v333
        %419 = vmatprep.subr.mxu0 0.0
        %420 = vmatpush1.msra.mxu0 %v334
        %421 = vmatprep.subr.mxu0 0.0
        %422 = vmatpush1.msra.mxu0 0.0
        %423 = vmatprep.subr.mxu0 0.0
        %424 = vmatpush1.msra.mxu0 0.0
        %425 = vmatprep.subr.mxu0 0.0
        %426 = vmatpush1.msra.mxu0 0.0
        %427 = vmatprep.subr.mxu0 0.0
        %428 = vmatpush1.msra.mxu0 0.0
        %429 = vmatprep.subr.mxu0 0.0
        %430 = vmatpush1.msra.mxu0 0.0
        %431 = vmatprep.subr.mxu0 0.0
        %432 = vmatpush1.msra.mxu0 0.0
        %433 = vmatprep.subr.mxu0 0.0
        %434 = vmatpush1.msra.mxu0 0.0
        %435 = vmatprep.subr.mxu0 0.0
        %436 = vmatpush1.msra.mxu0 0.0
        %437 = vmatprep.subr.mxu0 0.0
        %438 = vmatpush1.msra.mxu0 0.0
        %439 = vmatprep.subr.mxu0 0.0
        %440 = vmatpush1.msra.mxu0 0.0
        %441 = vmatprep.subr.mxu0 0.0
        %442 = vmatpush1.msra.mxu0 0.0
        %443 = vmatprep.subr.mxu0 0.0
        %444 = vmatpush1.msra.mxu0 0.0
        %445 = vmatprep.subr.mxu0 0.0
        %446 = vmatpush1.msra.mxu0 0.0
        %447 = vmatprep.subr.mxu0 0.0
        %448 = vmatpush1.msra.mxu0 0.0
        %449 = vmatprep.subr.mxu0 0.0
        %450 = vmatpush1.msra.mxu0 0.0
        %451 = vmatprep.subr.mxu0 0.0
        %452 = vmatpush1.msra.mxu0 0.0
        %453 = vmatprep.subr.mxu0 0.0
        %454 = vmatpush1.msra.mxu0 0.0
        %455 = vmatprep.subr.mxu0 0.0
        %456 = vmatpush1.msra.mxu0 0.0
        %457 = vmatprep.subr.mxu0 0.0
        %458 = vmatpush1.msra.mxu0 0.0
        %459 = vmatprep.subr.mxu0 0.0
        %460 = vmatpush1.msra.mxu0 0.0
        %461 = vmatprep.subr.mxu0 0.0
        %462 = vmatpush1.msra.mxu0 0.0
        %463 = vmatprep.subr.mxu0 0.0
        %464 = vmatpush1.msra.mxu0 0.0
        %465 = vmatprep.subr.mxu0 0.0
        %466 = vmatpush1.msra.mxu0 0.0
        %467 = vmatprep.subr.mxu0 0.0
        %468 = vmatpush1.msra.mxu0 0.0
        %469 = vmatprep.subr.mxu0 0.0
        %470 = vmatpush1.msra.mxu0 0.0
        %471 = vmatprep.subr.mxu0 0.0
        %472 = vmatpush1.msra.mxu0 0.0
        %473 = vmatprep.subr.mxu0 0.0
        %474 = vmatpush1.msra.mxu0 0.0
        %475 = vmatprep.subr.mxu0 0.0
        %476 = vmatpush1.msra.mxu0 0.0
        %477 = vmatprep.mubr.f32.mxu0 0.0
        %478 = vmatmul.mubr.f32.gmra.mrb[0].mxu0 %v411
        %v479 = vpop.f32.mrb[0].mxu0
        %v480 = vadd.f32 0.0, %v479
        %v481 = vpop.f32.mrb[0].mxu0
        %482 = vdwg.mxu0
        %483 = vrot.lane.b32.xlu0 %v330, 64
        %v484 = vpop.permute.xlu0 %483
        %v485 = vsel %vm335, %v484, 0
        %487 = vmatprep.subr.mxu0 0.0
        %488 = vmatpush1.msra.mxu0 %v331
        %489 = vmatprep.subr.mxu0 0.0
        %490 = vmatpush1.msra.mxu0 %v332
        %491 = vmatprep.subr.mxu0 0.0
        %492 = vmatpush1.msra.mxu0 %v333
        %493 = vmatprep.subr.mxu0 0.0
        %494 = vmatpush1.msra.mxu0 %v334
        %495 = vmatprep.subr.mxu0 0.0
        %496 = vmatpush1.msra.mxu0 0.0
        %497 = vmatprep.subr.mxu0 0.0
        %498 = vmatpush1.msra.mxu0 0.0
        %499 = vmatprep.subr.mxu0 0.0
        %500 = vmatpush1.msra.mxu0 0.0
        %501 = vmatprep.subr.mxu0 0.0
        %502 = vmatpush1.msra.mxu0 0.0
        %503 = vmatprep.subr.mxu0 0.0
        %504 = vmatpush1.msra.mxu0 0.0
        %505 = vmatprep.subr.mxu0 0.0
        %506 = vmatpush1.msra.mxu0 0.0
        %507 = vmatprep.subr.mxu0 0.0
        %508 = vmatpush1.msra.mxu0 0.0
        %509 = vmatprep.subr.mxu0 0.0
        %510 = vmatpush1.msra.mxu0 0.0
        %511 = vmatprep.subr.mxu0 0.0
        %512 = vmatpush1.msra.mxu0 0.0
        %513 = vmatprep.subr.mxu0 0.0
        %514 = vmatpush1.msra.mxu0 0.0
        %515 = vmatprep.subr.mxu0 0.0
        %516 = vmatpush1.msra.mxu0 0.0
        %517 = vmatprep.subr.mxu0 0.0
        %518 = vmatpush1.msra.mxu0 0.0
        %519 = vmatprep.subr.mxu0 0.0
        %520 = vmatpush1.msra.mxu0 0.0
        %521 = vmatprep.subr.mxu0 0.0
        %522 = vmatpush1.msra.mxu0 0.0
        %523 = vmatprep.subr.mxu0 0.0
        %524 = vmatpush1.msra.mxu0 0.0
        %525 = vmatprep.subr.mxu0 0.0
        %526 = vmatpush1.msra.mxu0 0.0
        %527 = vmatprep.subr.mxu0 0.0
        %528 = vmatpush1.msra.mxu0 0.0
        %529 = vmatprep.subr.mxu0 0.0
        %530 = vmatpush1.msra.mxu0 0.0
        %531 = vmatprep.subr.mxu0 0.0
        %532 = vmatpush1.msra.mxu0 0.0
        %533 = vmatprep.subr.mxu0 0.0
        %534 = vmatpush1.msra.mxu0 0.0
        %535 = vmatprep.subr.mxu0 0.0
        %536 = vmatpush1.msra.mxu0 0.0
        %537 = vmatprep.subr.mxu0 0.0
        %538 = vmatpush1.msra.mxu0 0.0
        %539 = vmatprep.subr.mxu0 0.0
        %540 = vmatpush1.msra.mxu0 0.0
        %541 = vmatprep.subr.mxu0 0.0
        %542 = vmatpush1.msra.mxu0 0.0
        %543 = vmatprep.subr.mxu0 0.0
        %544 = vmatpush1.msra.mxu0 0.0
        %545 = vmatprep.subr.mxu0 0.0
        %546 = vmatpush1.msra.mxu0 0.0
        %547 = vmatprep.subr.mxu0 0.0
        %548 = vmatpush1.msra.mxu0 0.0
        %549 = vmatprep.subr.mxu0 0.0
        %550 = vmatpush1.msra.mxu0 0.0
        %551 = vmatprep.mubr.f32.mxu0 0.0
        %552 = vmatmul.mubr.f32.gmra.mrb[0].mxu0 %v485
        %v553 = vpop.f32.mrb[0].mxu0
        %v554 = vadd.f32 0.0, %v553
        %v555 = vpop.f32.mrb[0].mxu0
        %556 = vdwg.mxu0
        %v557 = vmul.f32 %v406, %v406
        %v558 = vmul.f32 %v480, %v480
        %v559 = vadd.f32 %v557, %v558
        %v560 = vmul.f32 %v554, %v554
        %v561 = vadd.f32 %v559, %v560
        %v562 = vadd.f32 %v561, 1e-08
        %v563 = vrsqrt.pop %v562
        %v564 = vmul.f32 %v562, %v563
        %vm565 = vcmp.eq.f32.partialorder %v562, inf
        %v566 = vsel %vm565, %v562, %v564
        %vm567 = vcmp.eq.f32.partialorder %v562, 0.0
        %v568 = vand.u32 %v562, 2147483648
        %v569 = vsel %vm567, %v568, %v566
        %v570 = vld [vmem:[%s3] sm:$0xff]
        %v571 = vld [vmem:[%s3 + $0x8] sm:$0xff]
        %v572 = vld [vmem:[%s3 + $0x10] sm:$0xff]
        %v573 = vld [vmem:[%s3 + $0x18] sm:$0xff]
        %v574 = vld [vmem:[%s3 + $0x20] sm:$0xff]
        %v575 = vld [vmem:[%s3 + $0x28] sm:$0xff]
        %v576 = vld [vmem:[%s3 + $0x30] sm:$0xff]
        %v577 = vld [vmem:[%s3 + $0x38] sm:$0xff]
        %v579 = vsel %vm335, %v569, 0
        %581 = vmatprep.subr.mxu0 0.0
        %582 = vmatpush1.msra.mxu0 %v574
        %583 = vmatprep.subr.mxu0 0.0
        %584 = vmatpush1.msra.mxu0 %v575
        %585 = vmatprep.subr.mxu0 0.0
        %586 = vmatpush1.msra.mxu0 %v576
        %587 = vmatprep.subr.mxu0 0.0
        %588 = vmatpush1.msra.mxu0 %v577
        %589 = vmatprep.subr.mxu0 0.0
        %590 = vmatpush1.msra.mxu0 0.0
        %591 = vmatprep.subr.mxu0 0.0
        %592 = vmatpush1.msra.mxu0 0.0
        %593 = vmatprep.subr.mxu0 0.0
        %594 = vmatpush1.msra.mxu0 0.0
        %595 = vmatprep.subr.mxu0 0.0
        %596 = vmatpush1.msra.mxu0 0.0
        %597 = vmatprep.subr.mxu0 0.0
        %598 = vmatpush1.msra.mxu0 0.0
        %599 = vmatprep.subr.mxu0 0.0
        %600 = vmatpush1.msra.mxu0 0.0
        %601 = vmatprep.subr.mxu0 0.0
        %602 = vmatpush1.msra.mxu0 0.0
        %603 = vmatprep.subr.mxu0 0.0
        %604 = vmatpush1.msra.mxu0 0.0
        %605 = vmatprep.subr.mxu0 0.0
        %606 = vmatpush1.msra.mxu0 0.0
        %607 = vmatprep.subr.mxu0 0.0
        %608 = vmatpush1.msra.mxu0 0.0
        %609 = vmatprep.subr.mxu0 0.0
        %610 = vmatpush1.msra.mxu0 0.0
        %611 = vmatprep.subr.mxu0 0.0
        %612 = vmatpush1.msra.mxu0 0.0
        %613 = vmatprep.subr.mxu0 0.0
        %614 = vmatpush1.msra.mxu0 0.0
        %615 = vmatprep.subr.mxu0 0.0
        %616 = vmatpush1.msra.mxu0 0.0
        %617 = vmatprep.subr.mxu0 0.0
        %618 = vmatpush1.msra.mxu0 0.0
        %619 = vmatprep.subr.mxu0 0.0
        %620 = vmatpush1.msra.mxu0 0.0
        %621 = vmatprep.subr.mxu0 0.0
        %622 = vmatpush1.msra.mxu0 0.0
        %623 = vmatprep.subr.mxu0 0.0
        %624 = vmatpush1.msra.mxu0 0.0
        %625 = vmatprep.subr.mxu0 0.0
        %626 = vmatpush1.msra.mxu0 0.0
        %627 = vmatprep.subr.mxu0 0.0
        %628 = vmatpush1.msra.mxu0 0.0
        %629 = vmatprep.subr.mxu0 0.0
        %630 = vmatpush1.msra.mxu0 0.0
        %631 = vmatprep.subr.mxu0 0.0
        %632 = vmatpush1.msra.mxu0 0.0
        %633 = vmatprep.subr.mxu0 0.0
        %634 = vmatpush1.msra.mxu0 0.0
        %635 = vmatprep.subr.mxu0 0.0
        %636 = vmatpush1.msra.mxu0 0.0
        %637 = vmatprep.subr.mxu0 0.0
        %638 = vmatpush1.msra.mxu0 0.0
        %639 = vmatprep.subr.mxu0 0.0
        %640 = vmatpush1.msra.mxu0 0.0
        %641 = vmatprep.subr.mxu0 0.0
        %642 = vmatpush1.msra.mxu0 0.0
        %643 = vmatprep.subr.mxu0 0.0
        %644 = vmatpush1.msra.mxu0 0.0
        %645 = vmatprep.mubr.f32.mxu0 0.0
        %646 = vmatmul.mubr.f32.gmra.mrb[0].mxu0 %v579
        %v647 = vpop.f32.mrb[0].mxu0
        %v648 = vadd.f32 0.0, %v647
        %v649 = vpop.f32.mrb[0].mxu0
        %650 = vdwg.mxu0
        %v652 = vsel %vm335, %v329, 0
        %654 = vmatprep.subr.mxu0 0.0
        %655 = vmatpush1.msra.mxu0 %v570
        %656 = vmatprep.subr.mxu0 0.0
        %657 = vmatpush1.msra.mxu0 %v571
        %658 = vmatprep.subr.mxu0 0.0
        %659 = vmatpush1.msra.mxu0 %v572
        %660 = vmatprep.subr.mxu0 0.0
        %661 = vmatpush1.msra.mxu0 %v573
        %662 = vmatprep.subr.mxu0 0.0
        %663 = vmatpush1.msra.mxu0 0.0
        %664 = vmatprep.subr.mxu0 0.0
        %665 = vmatpush1.msra.mxu0 0.0
        %666 = vmatprep.subr.mxu0 0.0
        %667 = vmatpush1.msra.mxu0 0.0
        %668 = vmatprep.subr.mxu0 0.0
        %669 = vmatpush1.msra.mxu0 0.0
        %670 = vmatprep.subr.mxu0 0.0
        %671 = vmatpush1.msra.mxu0 0.0
        %672 = vmatprep.subr.mxu0 0.0
        %673 = vmatpush1.msra.mxu0 0.0
        %674 = vmatprep.subr.mxu0 0.0
        %675 = vmatpush1.msra.mxu0 0.0
        %676 = vmatprep.subr.mxu0 0.0
        %677 = vmatpush1.msra.mxu0 0.0
        %678 = vmatprep.subr.mxu0 0.0
        %679 = vmatpush1.msra.mxu0 0.0
        %680 = vmatprep.subr.mxu0 0.0
        %681 = vmatpush1.msra.mxu0 0.0
        %682 = vmatprep.subr.mxu0 0.0
        %683 = vmatpush1.msra.mxu0 0.0
        %684 = vmatprep.subr.mxu0 0.0
        %685 = vmatpush1.msra.mxu0 0.0
        %686 = vmatprep.subr.mxu0 0.0
        %687 = vmatpush1.msra.mxu0 0.0
        %688 = vmatprep.subr.mxu0 0.0
        %689 = vmatpush1.msra.mxu0 0.0
        %690 = vmatprep.subr.mxu0 0.0
        %691 = vmatpush1.msra.mxu0 0.0
        %692 = vmatprep.subr.mxu0 0.0
        %693 = vmatpush1.msra.mxu0 0.0
        %694 = vmatprep.subr.mxu0 0.0
        %695 = vmatpush1.msra.mxu0 0.0
        %696 = vmatprep.subr.mxu0 0.0
        %697 = vmatpush1.msra.mxu0 0.0
        %698 = vmatprep.subr.mxu0 0.0
        %699 = vmatpush1.msra.mxu0 0.0
        %700 = vmatprep.subr.mxu0 0.0
        %701 = vmatpush1.msra.mxu0 0.0
        %702 = vmatprep.subr.mxu0 0.0
        %703 = vmatpush1.msra.mxu0 0.0
        %704 = vmatprep.subr.mxu0 0.0
        %705 = vmatpush1.msra.mxu0 0.0
        %706 = vmatprep.subr.mxu0 0.0
        %707 = vmatpush1.msra.mxu0 0.0
        %708 = vmatprep.subr.mxu0 0.0
        %709 = vmatpush1.msra.mxu0 0.0
        %710 = vmatprep.subr.mxu0 0.0
        %711 = vmatpush1.msra.mxu0 0.0
        %712 = vmatprep.subr.mxu0 0.0
        %713 = vmatpush1.msra.mxu0 0.0
        %714 = vmatprep.subr.mxu0 0.0
        %715 = vmatpush1.msra.mxu0 0.0
        %716 = vmatprep.subr.mxu0 0.0
        %717 = vmatpush1.msra.mxu0 0.0
        %718 = vmatprep.mubr.f32.mxu0 0.0
        %719 = vmatmul.mubr.f32.gmra.mrb[0].mxu0 %v652
        %v720 = vpop.f32.mrb[0].mxu0
        %v721 = vadd.f32 %v648, %v720
        %v722 = vpop.f32.mrb[0].mxu0
        %723 = vdwg.mxu0
        %v724 = vld [vmem:[%s4] sm:$0x1]
        %v726 = vlaneseq
        %v727 = vshrl.u32 %v726, 7
        %v728 = vsub.s32 0, %v727
        %v729 = vrot.slane %v724, %v728
        %v731 = vadd.f32 %v721, %v729
        %v732 = vxor.u32 %v731, 2147483648
        %v733 = vmul.f32 %v732, 1.442695
        %v734 = vpow.pop %v733
        %v735 = vadd.f32 %v734, 1.0
        %v736 = vrcp.pop %v735
        %v737 = vmul.f32 1.0, %v736
        %v738 = vmul.f32 %v731, %v737
        %v739 = vld [vmem:[%s5] sm:$0xff]
        %v740 = vld [vmem:[%s5 + $0x8] sm:$0xff]
        %v741 = vld [vmem:[%s5 + $0x10] sm:$0xff]
        %v742 = vld [vmem:[%s5 + $0x18] sm:$0xff]
        %v743 = vld [vmem:[%s6] sm:$0x1]
        %v745 = vlaneseq
        %v746 = vshrl.u32 %v745, 7
        %v747 = vsub.s32 0, %v746
        %v748 = vrot.slane %v743, %v747
        %v751 = vsel %vm335, %v738, 0
        %753 = vmatprep.subr.mxu0 0.0
        %754 = vmatpush1.msra.mxu0 %v739
        %755 = vmatprep.subr.mxu0 0.0
        %756 = vmatpush1.msra.mxu0 %v740
        %757 = vmatprep.subr.mxu0 0.0
        %758 = vmatpush1.msra.mxu0 %v741
        %759 = vmatprep.subr.mxu0 0.0
        %760 = vmatpush1.msra.mxu0 %v742
        %761 = vmatprep.subr.mxu0 0.0
        %762 = vmatpush1.msra.mxu0 0.0
        %763 = vmatprep.subr.mxu0 0.0
        %764 = vmatpush1.msra.mxu0 0.0
        %765 = vmatprep.subr.mxu0 0.0
        %766 = vmatpush1.msra.mxu0 0.0
        %767 = vmatprep.subr.mxu0 0.0
        %768 = vmatpush1.msra.mxu0 0.0
        %769 = vmatprep.subr.mxu0 0.0
        %770 = vmatpush1.msra.mxu0 0.0
        %771 = vmatprep.subr.mxu0 0.0
        %772 = vmatpush1.msra.mxu0 0.0
        %773 = vmatprep.subr.mxu0 0.0
        %774 = vmatpush1.msra.mxu0 0.0
        %775 = vmatprep.subr.mxu0 0.0
        %776 = vmatpush1.msra.mxu0 0.0
        %777 = vmatprep.subr.mxu0 0.0
        %778 = vmatpush1.msra.mxu0 0.0
        %779 = vmatprep.subr.mxu0 0.0
        %780 = vmatpush1.msra.mxu0 0.0
        %781 = vmatprep.subr.mxu0 0.0
        %782 = vmatpush1.msra.mxu0 0.0
        %783 = vmatprep.subr.mxu0 0.0
        %784 = vmatpush1.msra.mxu0 0.0
        %785 = vmatprep.subr.mxu0 0.0
        %786 = vmatpush1.msra.mxu0 0.0
        %787 = vmatprep.subr.mxu0 0.0
        %788 = vmatpush1.msra.mxu0 0.0
        %789 = vmatprep.subr.mxu0 0.0
        %790 = vmatpush1.msra.mxu0 0.0
        %791 = vmatprep.subr.mxu0 0.0
        %792 = vmatpush1.msra.mxu0 0.0
        %793 = vmatprep.subr.mxu0 0.0
        %794 = vmatpush1.msra.mxu0 0.0
        %795 = vmatprep.subr.mxu0 0.0
        %796 = vmatpush1.msra.mxu0 0.0
        %797 = vmatprep.subr.mxu0 0.0
        %798 = vmatpush1.msra.mxu0 0.0
        %799 = vmatprep.subr.mxu0 0.0
        %800 = vmatpush1.msra.mxu0 0.0
        %801 = vmatprep.subr.mxu0 0.0
        %802 = vmatpush1.msra.mxu0 0.0
        %803 = vmatprep.subr.mxu0 0.0
        %804 = vmatpush1.msra.mxu0 0.0
        %805 = vmatprep.subr.mxu0 0.0
        %806 = vmatpush1.msra.mxu0 0.0
        %807 = vmatprep.subr.mxu0 0.0
        %808 = vmatpush1.msra.mxu0 0.0
        %809 = vmatprep.subr.mxu0 0.0
        %810 = vmatpush1.msra.mxu0 0.0
        %811 = vmatprep.subr.mxu0 0.0
        %812 = vmatpush1.msra.mxu0 0.0
        %813 = vmatprep.subr.mxu0 0.0
        %814 = vmatpush1.msra.mxu0 0.0
        %815 = vmatprep.subr.mxu0 0.0
        %816 = vmatpush1.msra.mxu0 0.0
        %817 = vmatprep.mubr.f32.mxu0 0.0
        %818 = vmatmul.mubr.f32.gmra.mrb[0].mxu0 %v751
        %v819 = vpop.f32.mrb[0].mxu0
        %v820 = vadd.f32 %v748, %v819
        %v821 = vpop.f32.mrb[0].mxu0
        %822 = vdwg.mxu0
        %824 = vrot.lane.b32.xlu0 %v406, 96
        %v825 = vpop.permute.xlu0 %824
        %v827 = vmul.f32 %v406, %v825
        %829 = vrot.lane.b32.xlu0 %v480, 96
        %v830 = vpop.permute.xlu0 %829
        %v832 = vmul.f32 %v480, %v830
        %v833 = vadd.f32 %v827, %v832
        %835 = vrot.lane.b32.xlu0 %v554, 96
        %v836 = vpop.permute.xlu0 %835
        %v838 = vmul.f32 %v554, %v836
        %v839 = vadd.f32 %v833, %v838
        %v840 = vadd.f32 %v329, %v820
        %842 = vrot.lane.b32.xlu0 %v839, 64
        %v843 = vpop.permute.xlu0 %842
        %v845 = vmul.f32 %v820, %v843
        %847 = vrot.lane.b32.xlu0 %v845, 64
        %v848 = vpop.permute.xlu0 %847
        %v850 = vadd.f32 %v840, %v848
        %851 = vst.msk [vmem:[%s313] sm:$0xff] %vm335, %v850
        %v852 = vmul.f32 %v820, %v406
        %854 = vrot.lane.b32.xlu0 %v852, 96
        %v855 = vpop.permute.xlu0 %854
        %v857 = vadd.f32 %v330, %v855
        %858 = vst.msk [vmem:[%s320] sm:$0xff] %vm335, %v857
        %v859 = vmul.f32 %v820, %v480
        %v860 = vadd.f32 %v330, %v859
        %vm861 = vcmask 523520
        %862 = vst.msk [vmem:[%s320] sm:$0xff] %vm861, %v860
        %v863 = vmul.f32 %v820, %v554
        %865 = vrot.lane.b32.xlu0 %v863, 32
        %v866 = vpop.permute.xlu0 %865
        %v868 = vadd.f32 %v330, %v866
        %vm869 = vcmask 785920
        %870 = vst.msk [vmem:[%s320] sm:$0xff] %vm869, %v868
        %s871 = sand.u32 %s191, 1
        %s872 = scalar_lea.sflag [#allocation3], %s871
        %s873 = sand.u32 %s191, 1
        %s874 = smul.addr %s873, 8
        %s875 = scalar_lea.vmem [#allocation2], %s874
        %s876 = sand.u32 %s217, 1
        %s877 = scalar_lea.sflag [#allocation5], %s876
        %s878 = sand.u32 %s217, 1
        %s879 = smul.addr %s878, 8
        %s880 = scalar_lea.vmem [#allocation4], %s879
        // Predicated region
        $region49: #{tpu_custom_call.1} parent=47 // pred_check
          %p881 = pneg %p201
        $region50: #{tpu_custom_call.1} parent=47 // pred_check_branch
          %883 = sbr.rel (%p881) target = $region52
        $region51: #{tpu_custom_call.1} parent=47 // pred_region
          %s885 = ssub.s32 128, 128
          %886 = vsyncadd %s872, %s885
          %s887 = smul.addr %s26, 128
          %s888 = scalar_lea.hbm %s7, %s887
          %s890 = sshll.u32 %s875, 4
          %s891 = int_to_ptr.vmem [resolvable:$true] %s890
          %893 = dma.vmem_to_hbm [thread:$0]  %s891, 128, %s888, %s872
        $region52: #{tpu_custom_call.1} parent=47 // pred_fallthru
          _
        // Predicated region
        $region53: #{tpu_custom_call.1} parent=47 // pred_check
          %p894 = pneg %p227
        $region54: #{tpu_custom_call.1} parent=47 // pred_check_branch
          %896 = sbr.rel (%p894) target = $region56
        $region55: #{tpu_custom_call.1} parent=47 // pred_region
          %s898 = ssub.s32 128, 128
          %899 = vsyncadd %s877, %s898
          %s900 = smul.addr %s26, 128
          %s901 = scalar_lea.hbm %s8, %s900
          %s903 = sshll.u32 %s880, 4
          %s904 = int_to_ptr.vmem [resolvable:$true] %s903
          %906 = dma.vmem_to_hbm [thread:$0]  %s904, 128, %s901, %s877
        $region56: #{tpu_custom_call.1} parent=47 // pred_fallthru
          _
      $region48: #{tpu_custom_call.1} parent=5 // pred_fallthru
        _
      %p907 = scmp.le.s32.totalorder 2, %s21
      // Predicated region
      $region57: #{tpu_custom_call.1} parent=5 // pred_check
        %p908 = pneg %p907
      $region58: #{tpu_custom_call.1} parent=5 // pred_check_branch
        %910 = sbr.rel (%p908) target = $region60
      $region59: #{tpu_custom_call.1} parent=5 // pred_region
        %s911 = ssub.s32 %s21, 2
        // Predicated region
        $region61: #{tpu_custom_call.1} parent=59 // pred_check
          %p912 = pneg %p207
        $region62: #{tpu_custom_call.1} parent=59 // pred_check_branch
          %914 = sbr.rel (%p912) target = $region64
        $region63: #{tpu_custom_call.1} parent=59 // pred_region
          %s915 = sand.u32 %s192, 1
          %s916 = scalar_lea.sflag [#allocation3], %s915
          %s917 = sand.u32 %s192, 1
          %s918 = smul.addr %s917, 8
          %s919 = scalar_lea.vmem [#allocation2], %s918
          %920 = dma.done %s916, 128
        $region64: #{tpu_custom_call.1} parent=59 // pred_fallthru
          _
        // Predicated region
        $region65: #{tpu_custom_call.1} parent=59 // pred_check
          %p921 = pneg %p233
        $region66: #{tpu_custom_call.1} parent=59 // pred_check_branch
          %923 = sbr.rel (%p921) target = $region68
        $region67: #{tpu_custom_call.1} parent=59 // pred_region
          %s924 = sand.u32 %s218, 1
          %s925 = scalar_lea.sflag [#allocation5], %s924
          %s926 = sand.u32 %s218, 1
          %s927 = smul.addr %s926, 8
          %s928 = scalar_lea.vmem [#allocation4], %s927
          %929 = dma.done %s925, 128
        $region68: #{tpu_custom_call.1} parent=59 // pred_fallthru
          _
      $region60: #{tpu_custom_call.1} parent=5 // pred_fallthru
        _
    $region6: #{tpu_custom_call.1} parent=1 // loop_footer
      %s25 = sadd.s32 1, %s21
    $region7: #{tpu_custom_call.1} parent=1 // loop_footer_branch
      %20 = sbr.rel target = $region3
    $region8: #{tpu_custom_call.1} parent=1 // loop_exit
      _
    %930 = vsyncpa [#allocation3], 1
    %s931 = scalar_lea.sflag [#allocation3], 1
    %932 = vsyncpa %s931, 1
    %933 = vsyncpa [#allocation5], 1
    %s934 = scalar_lea.sflag [#allocation5], 1
    %935 = vsyncpa %s934, 1

</llo_original>
